<compile_context>
chip_gen: v6e
topology: v6e:2x2x1
jax: 0.10.0
libtpu: 0.0.40
codegen_flags: <defaults>
</compile_context>

<pallas_src>
import numpy as np
import jax
import jax.numpy as jnp
from jax.experimental import pallas as pl
from jax.experimental.pallas import tpu as pltpu

EPSILON = float(np.finfo(np.float32).eps)

# ---- model hyperparameters (small; comp == n_comp as the module requires) ----
N_LAYERS = 3
COMP = 32          # comp == n_comp
FEATURES = 64
N_CLASSES = 8
BATCH = 8
L_1 = 0.0
L_2 = 0.0


def _unsupernet_kernel(x_ref, h0_ref, w1cat_ref, w2cat_ref, wct_ref, bc_ref, out_ref):
    """Whole-network forward in one kernel (everything VMEM-resident).

    x_ref     : (BATCH, FEATURES)
    h0_ref    : (BATCH, COMP)
    w1cat_ref : (COMP, N_LAYERS * COMP)      -- fc1 weights, pre-transposed + concatenated
    w2cat_ref : (FEATURES, N_LAYERS * COMP)  -- fc2 weights, pre-transposed + concatenated
    wct_ref   : (COMP, N_CLASSES)            -- classifier weight, pre-transposed
    bc_ref    : (1, N_CLASSES)               -- classifier bias
    out_ref   : (BATCH, N_CLASSES)
    """
    x = x_ref[...]
    h = h0_ref[...]
    w1cat = w1cat_ref[...]

    # All per-layer numerators in one wide MXU matmul: (B,F) @ (F, L*C) -> (B, L*C).
    # numer does not depend on h, so it is hoisted off the serial h chain entirely.
    numer_all = jnp.dot(x, w2cat_ref[...], preferred_element_type=jnp.float32)

    # n_layers is small & static -> unrolled Python loop; each layer is one small
    # MXU matmul plus the VPU/EUP multiplicative update.
    for i in range(N_LAYERS):
        w1t = w1cat[:, i * COMP:(i + 1) * COMP]            # (COMP, COMP), static slice
        denom = jnp.dot(h, w1t, preferred_element_type=jnp.float32)
        if L_2:                                            # compile-time dead at 0.0
            denom = denom + L_2 * h
        if L_1:                                            # compile-time dead at 0.0
            denom = denom + L_1
        denom = denom + EPSILON
        numer = numer_all[:, i * COMP:(i + 1) * COMP]      # static slice, free
        # exact reciprocal (approx=False default) keeps 1e-5 tolerance
        h = h * numer * pl.reciprocal(denom)

    out_ref[...] = (jnp.dot(h, wct_ref[...], preferred_element_type=jnp.float32)
                    + bc_ref[...])


def prepare_params(w1, w2, wc, bc):
    """One-time (init-time) re-layout of torch-style Linear weights.

    w1: (L, C, C), w2: (L, C, F), wc: (NC, C), bc: (NC,)
    Returns kernel-layout params; this is NOT on the per-call forward path.
    """
    # column block i of w1cat == w1[i].T  -> h @ w1cat[:, i*C:(i+1)*C] == fc1_i(h)
    w1cat = jnp.transpose(w1, (2, 0, 1)).reshape(COMP, N_LAYERS * COMP)
    # column block i of w2cat == w2[i].T  -> x @ w2cat gives all layer numerators at once
    w2cat = jnp.transpose(w2, (2, 0, 1)).reshape(FEATURES, N_LAYERS * COMP)
    wct = wc.T                                              # (C, NC)
    bc2 = bc.reshape(1, -1)                                 # (1, NC)
    return w1cat, w2cat, wct, bc2


def unsupernet_forward(x, h0, w1cat, w2cat, wct, bc2):
    """x:(B,F), h0:(B,C), plus pre-laid-out params from prepare_params()."""
    vmem = pl.BlockSpec(memory_space=pltpu.MemorySpace.VMEM)
    # NOTE: at realistic batch sizes, replace the no-grid call with a batch grid
    # (tiles >= (512, FEATURES), dimension_semantics=("parallel",)) and keep the
    # weights as whole-array VMEM residents; at BATCH=8 that would be pure overhead.
    out = pl.pallas_call(
        _unsupernet_kernel,
        out_shape=jax.ShapeDtypeStruct((x.shape[0], N_CLASSES), jnp.float32),
        in_specs=[vmem, vmem, vmem, vmem, vmem, vmem],
        out_specs=vmem,
    )(x, h0, w1cat, w2cat, wct, bc2)
    return out


def reference_forward(x, h0, w1, w2, wc, bc):
    h = h0
    for i in range(N_LAYERS):
        denom = h @ w1[i].T + L_2 * h + L_1 + EPSILON
        numer = x @ w2[i].T
        h = (numer / denom) * h
    return h @ wc.T + bc


if __name__ == "__main__":
    key = jax.random.PRNGKey(0)
    k_x, k_h, k_w1, k_w2, k_wc, k_bc = jax.random.split(key, 6)

    # NMF-style nonnegative inputs / weights (deterministic).
    x = jax.random.uniform(k_x, (BATCH, FEATURES), dtype=jnp.float32)
    h0 = jax.random.uniform(k_h, (BATCH, COMP), dtype=jnp.float32)  # torch.rand h
    w1 = jax.random.uniform(k_w1, (N_LAYERS, COMP, COMP), dtype=jnp.float32,
                            minval=0.0, maxval=1.0) * 0.1
    w2 = jax.random.uniform(k_w2, (N_LAYERS, COMP, FEATURES), dtype=jnp.float32,
                            minval=0.0, maxval=1.0) * 0.1
    wc = jax.random.uniform(k_wc, (N_CLASSES, COMP), dtype=jnp.float32,
                            minval=-0.1, maxval=0.1)
    bc = jax.random.uniform(k_bc, (N_CLASSES,), dtype=jnp.float32,
                            minval=-0.1, maxval=0.1)

    # One-time parameter layout prep (kept out of the forward call path).
    w1cat, w2cat, wct, bc2 = prepare_params(w1, w2, wc, bc)
    w1cat, w2cat, wct, bc2 = jax.block_until_ready((w1cat, w2cat, wct, bc2))

    out = unsupernet_forward(x, h0, w1cat, w2cat, wct, bc2)
    out = jax.block_until_ready(out)

    ref = reference_forward(x, h0, w1, w2, wc, bc)
    np.testing.assert_allclose(np.asarray(out), np.asarray(ref),
                               rtol=1e-5, atol=1e-5)
    print("KERNEL_OK")
</pallas_src>

<mosaic_0001>
module attributes {stable_mosaic.version = 11 : i64} {
  func.func @_unsupernet_kernel(%arg0: memref<8x64xf32, #tpu.memory_space<vmem>>, %arg1: memref<8x32xf32, #tpu.memory_space<vmem>>, %arg2: memref<32x96xf32, #tpu.memory_space<vmem>>, %arg3: memref<64x96xf32, #tpu.memory_space<vmem>>, %arg4: memref<32x8xf32, #tpu.memory_space<vmem>>, %arg5: memref<1x8xf32, #tpu.memory_space<vmem>>, %arg6: memref<8x8xf32, #tpu.memory_space<vmem>>) attributes {dimension_semantics = [], scalar_prefetch = 0 : i64, scratch_operands = 0 : i64, tpu.core_type = #tpu.core_type<tc>} {
    %c0 = arith.constant 0 : index
    %c0_0 = arith.constant 0 : index
    %0 = vector.load %arg0[%c0, %c0_0] : memref<8x64xf32, #tpu.memory_space<vmem>>, vector<8x64xf32>
    %c0_1 = arith.constant 0 : index
    %c0_2 = arith.constant 0 : index
    %1 = vector.load %arg1[%c0_1, %c0_2] : memref<8x32xf32, #tpu.memory_space<vmem>>, vector<8x32xf32>
    %c0_3 = arith.constant 0 : index
    %c0_4 = arith.constant 0 : index
    %2 = vector.load %arg2[%c0_3, %c0_4] : memref<32x96xf32, #tpu.memory_space<vmem>>, vector<32x96xf32>
    %c0_5 = arith.constant 0 : index
    %c0_6 = arith.constant 0 : index
    %3 = vector.load %arg3[%c0_5, %c0_6] : memref<64x96xf32, #tpu.memory_space<vmem>>, vector<64x96xf32>
    %cst = arith.constant dense<0.000000e+00> : vector<8x96xf32>
    %4 = tpu.matmul %0, %3, %cst {dimension_numbers = #tpu.dot_dimension_numbers<[1], [0], [0], [1], [0, 0, 1, 1], [], []>} : vector<8x64xf32>, vector<64x96xf32>, vector<8x96xf32> -> vector<8x96xf32>
    %5 = vector.extract_strided_slice %2 {offsets = [0, 0], sizes = [32, 32], strides = [1, 1]} : vector<32x96xf32> to vector<32x32xf32>
    %cst_7 = arith.constant dense<0.000000e+00> : vector<8x32xf32>
    %6 = tpu.matmul %1, %5, %cst_7 {dimension_numbers = #tpu.dot_dimension_numbers<[1], [0], [0], [1], [0, 0, 1, 1], [], []>} : vector<8x32xf32>, vector<32x32xf32>, vector<8x32xf32> -> vector<8x32xf32>
    %cst_8 = arith.constant 1.1920929E-7 : f32
    %7 = vector.broadcast %cst_8 : f32 to vector<8x32xf32>
    %8 = arith.addf %6, %7 : vector<8x32xf32>
    %9 = vector.extract_strided_slice %4 {offsets = [0, 0], sizes = [8, 32], strides = [1, 1]} : vector<8x96xf32> to vector<8x32xf32>
    %10 = arith.mulf %1, %9 : vector<8x32xf32>
    %11 = tpu.reciprocal %8 : vector<8x32xf32> -> vector<8x32xf32>
    %12 = arith.mulf %10, %11 : vector<8x32xf32>
    %13 = vector.extract_strided_slice %2 {offsets = [0, 32], sizes = [32, 32], strides = [1, 1]} : vector<32x96xf32> to vector<32x32xf32>
    %cst_9 = arith.constant dense<0.000000e+00> : vector<8x32xf32>
    %14 = tpu.matmul %12, %13, %cst_9 {dimension_numbers = #tpu.dot_dimension_numbers<[1], [0], [0], [1], [0, 0, 1, 1], [], []>} : vector<8x32xf32>, vector<32x32xf32>, vector<8x32xf32> -> vector<8x32xf32>
    %cst_10 = arith.constant 1.1920929E-7 : f32
    %15 = vector.broadcast %cst_10 : f32 to vector<8x32xf32>
    %16 = arith.addf %14, %15 : vector<8x32xf32>
    %17 = vector.extract_strided_slice %4 {offsets = [0, 32], sizes = [8, 32], strides = [1, 1]} : vector<8x96xf32> to vector<8x32xf32>
    %18 = arith.mulf %12, %17 : vector<8x32xf32>
    %19 = tpu.reciprocal %16 : vector<8x32xf32> -> vector<8x32xf32>
    %20 = arith.mulf %18, %19 : vector<8x32xf32>
    %21 = vector.extract_strided_slice %2 {offsets = [0, 64], sizes = [32, 32], strides = [1, 1]} : vector<32x96xf32> to vector<32x32xf32>
    %cst_11 = arith.constant dense<0.000000e+00> : vector<8x32xf32>
    %22 = tpu.matmul %20, %21, %cst_11 {dimension_numbers = #tpu.dot_dimension_numbers<[1], [0], [0], [1], [0, 0, 1, 1], [], []>} : vector<8x32xf32>, vector<32x32xf32>, vector<8x32xf32> -> vector<8x32xf32>
    %cst_12 = arith.constant 1.1920929E-7 : f32
    %23 = vector.broadcast %cst_12 : f32 to vector<8x32xf32>
    %24 = arith.addf %22, %23 : vector<8x32xf32>
    %25 = vector.extract_strided_slice %4 {offsets = [0, 64], sizes = [8, 32], strides = [1, 1]} : vector<8x96xf32> to vector<8x32xf32>
    %26 = arith.mulf %20, %25 : vector<8x32xf32>
    %27 = tpu.reciprocal %24 : vector<8x32xf32> -> vector<8x32xf32>
    %28 = arith.mulf %26, %27 : vector<8x32xf32>
    %c0_13 = arith.constant 0 : index
    %c0_14 = arith.constant 0 : index
    %29 = vector.load %arg4[%c0_13, %c0_14] : memref<32x8xf32, #tpu.memory_space<vmem>>, vector<32x8xf32>
    %cst_15 = arith.constant dense<0.000000e+00> : vector<8x8xf32>
    %30 = tpu.matmul %28, %29, %cst_15 {dimension_numbers = #tpu.dot_dimension_numbers<[1], [0], [0], [1], [0, 0, 1, 1], [], []>} : vector<8x32xf32>, vector<32x8xf32>, vector<8x8xf32> -> vector<8x8xf32>
    %c0_16 = arith.constant 0 : index
    %c0_17 = arith.constant 0 : index
    %31 = vector.load %arg5[%c0_16, %c0_17] : memref<1x8xf32, #tpu.memory_space<vmem>>, vector<1x8xf32>
    %32 = vector.broadcast %31 : vector<1x8xf32> to vector<8x8xf32>
    %33 = arith.addf %30, %32 : vector<8x8xf32>
    %c0_18 = arith.constant 0 : index
    %c0_19 = arith.constant 0 : index
    %34 = vector.load %arg6[%c0_18, %c0_19] : memref<8x8xf32, #tpu.memory_space<vmem>>, vector<8x8xf32>
    tpu.vector_store %arg6[%c0_18, %c0_19], %33 {strides = array<i32>} : memref<8x8xf32, #tpu.memory_space<vmem>>, vector<8x8xf32>,
    return
  }
}

</mosaic_0001>

<llo_original>
// kernel: tpu_custom_call.1
$region0: #{tpu_custom_call.1}
  #allocation0 [shape = 'u32[]', space=smem, size = 0x4, offset = 0x4, fixed_abs, tag = 'smem constant byte address 0x4 - core index']
  #allocation1 [shape = 'u32[144,128]{1,0:T(1,128)}', space=vmem, size = 0x12000, scoped, tag = 'internal scratch']
  %s0 = inlined_call_operand.vmem [shape: f32[8,64], index: 0, kind: input, shape index: {}]
  %s1 = inlined_call_operand.hbm [shape: f32[8,32], index: 1, kind: input, shape index: {}]
  %s2 = inlined_call_operand.vmem [shape: f32[32,96], index: 2, kind: input, shape index: {}]
  %s3 = inlined_call_operand.hbm [shape: f32[64,96], index: 3, kind: input, shape index: {}]
  %s4 = inlined_call_operand.vmem [shape: f32[32,8], index: 4, kind: input, shape index: {}]
  %s5 = inlined_call_operand.vmem [shape: f32[1,8], index: 5, kind: input, shape index: {}]
  %s6 = inlined_call_operand.hbm [shape: f32[8,8], index: 6, kind: output, shape index: {}]
  %s7 = sld [smem:[#allocation0]]
  $region42: #{tpu_custom_call.1} parent=0
    _
  %s9 = ssub.s32 1, %s7
  %s10 = scalar_select 0, %s9, %s7
  $region1: #{tpu_custom_call.1} parent=0
    #allocation2 [shape = 'u8[4096]{0}', space=vmem, size = 0x1000, scoped, tag = 'input window, operand 1, single buffered']
    #allocation3 [shape = 's32[1]{0}', space=sflag, size = 0x4, scoped, tag = 'scoped memory for tpu_custom_call.1']
    #allocation4 [shape = 's32[1]{0}', space=sflag, size = 0x4, scoped, tag = 'scoped memory for tpu_custom_call.1']
    #allocation5 [shape = 'u8[32768]{0}', space=vmem, size = 0x8000, scoped, tag = 'input window, operand 3, single buffered']
    #allocation6 [shape = 's32[1]{0}', space=sflag, size = 0x4, scoped, tag = 'scoped memory for tpu_custom_call.1']
    #allocation7 [shape = 'u8[4096]{0}', space=vmem, size = 0x1000, scoped, tag = 'output window, operand 0, single buffered']
    %11 = vsyncpa [#allocation3], 0
    %12 = vsyncpa [#allocation6], 0
    %13 = vsyncpa [#allocation4], 0
    // Predicated region
    $region2: #{tpu_custom_call.1} parent=1 // pred_check
      _
    $region3: #{tpu_custom_call.1} parent=1 // pred_check_branch
      %15 = sbr.rel (0) target = $region5
    $region4: #{tpu_custom_call.1} parent=1 // pred_region
      _
    $region5: #{tpu_custom_call.1} parent=1 // pred_fallthru
      _
    // Predicated region
    $region6: #{tpu_custom_call.1} parent=1 // pred_check
      _
    $region7: #{tpu_custom_call.1} parent=1 // pred_check_branch
      %17 = sbr.rel (0) target = $region9
    $region8: #{tpu_custom_call.1} parent=1 // pred_region
      %s19 = ssub.s32 128, 128
      %20 = vsyncadd [#allocation3], %s19
      %s22 = sshll.u32 [#allocation2], 4
      %s23 = int_to_ptr.vmem [resolvable:$true] %s22
      %25 = dma.hbm_to_vmem [thread:$0]  %s1, 128, %s23, [#allocation3]
    $region9: #{tpu_custom_call.1} parent=1 // pred_fallthru
      _
    // Predicated region
    $region10: #{tpu_custom_call.1} parent=1 // pred_check
      _
    $region11: #{tpu_custom_call.1} parent=1 // pred_check_branch
      %27 = sbr.rel (0) target = $region13
    $region12: #{tpu_custom_call.1} parent=1 // pred_region
      _
    $region13: #{tpu_custom_call.1} parent=1 // pred_fallthru
      _
    // Predicated region
    $region14: #{tpu_custom_call.1} parent=1 // pred_check
      _
    $region15: #{tpu_custom_call.1} parent=1 // pred_check_branch
      %29 = sbr.rel (0) target = $region17
    $region16: #{tpu_custom_call.1} parent=1 // pred_region
      %s31 = ssub.s32 1024, 1024
      %32 = vsyncadd [#allocation6], %s31
      %s33 = sshll.u32 [#allocation5], 4
      %s34 = int_to_ptr.vmem [resolvable:$true] %s33
      %39 = dma.hbm_to_vmem [thread:$0]  %s3, 1024, %s34, [#allocation6], 128, 128, 8
    $region17: #{tpu_custom_call.1} parent=1 // pred_fallthru
      _
    // Predicated region
    $region18: #{tpu_custom_call.1} parent=1 // pred_check
      _
    $region19: #{tpu_custom_call.1} parent=1 // pred_check_branch
      %41 = sbr.rel (0) target = $region21
    $region20: #{tpu_custom_call.1} parent=1 // pred_region
      _
    $region21: #{tpu_custom_call.1} parent=1 // pred_fallthru
      _
    // Predicated region
    $region22: #{tpu_custom_call.1} parent=1 // pred_check
      _
    $region23: #{tpu_custom_call.1} parent=1 // pred_check_branch
      %43 = sbr.rel (0) target = $region25
    $region24: #{tpu_custom_call.1} parent=1 // pred_region
      _
    $region25: #{tpu_custom_call.1} parent=1 // pred_fallthru
      _
    // Predicated region
    $region26: #{tpu_custom_call.1} parent=1 // pred_check
      _
    $region27: #{tpu_custom_call.1} parent=1 // pred_check_branch
      %45 = sbr.rel (0) target = $region29
    $region28: #{tpu_custom_call.1} parent=1 // pred_region
      %46 = dma.done [#allocation3], 128
    $region29: #{tpu_custom_call.1} parent=1 // pred_fallthru
      _
    // Predicated region
    $region30: #{tpu_custom_call.1} parent=1 // pred_check
      _
    $region31: #{tpu_custom_call.1} parent=1 // pred_check_branch
      %48 = sbr.rel (0) target = $region33
    $region32: #{tpu_custom_call.1} parent=1 // pred_region
      %49 = dma.done [#allocation6], 1024
    $region33: #{tpu_custom_call.1} parent=1 // pred_fallthru
      _
    %v50 = vld [vmem:[%s0] sm:$0xff]
    %v51 = vld [vmem:[#allocation2] sm:$0xff]
    %v52 = vld [vmem:[%s2] sm:$0xff]
    %v53 = vld [vmem:[%s2 + $0x8] sm:$0xff]
    %v54 = vld [vmem:[%s2 + $0x10] sm:$0xff]
    %v55 = vld [vmem:[%s2 + $0x18] sm:$0xff]
    %v56 = vld [vmem:[#allocation5] sm:$0xff]
    %v57 = vld [vmem:[#allocation5 + $0x8] sm:$0xff]
    %v58 = vld [vmem:[#allocation5 + $0x10] sm:$0xff]
    %v59 = vld [vmem:[#allocation5 + $0x18] sm:$0xff]
    %v60 = vld [vmem:[#allocation5 + $0x20] sm:$0xff]
    %v61 = vld [vmem:[#allocation5 + $0x28] sm:$0xff]
    %v62 = vld [vmem:[#allocation5 + $0x30] sm:$0xff]
    %v63 = vld [vmem:[#allocation5 + $0x38] sm:$0xff]
    %vm64 = vcmask 523264
    %v66 = vsel %vm64, %v50, 0
    %68 = vmatprep.subr.mxu0 0.0
    %69 = vmatpush1.msra.mxu0 0.0
    %70 = vmatprep.subr.mxu0 0.0
    %71 = vmatpush1.msra.mxu0 0.0
    %72 = vmatprep.subr.mxu0 0.0
    %73 = vmatpush1.msra.mxu0 0.0
    %74 = vmatprep.subr.mxu0 0.0
    %75 = vmatpush1.msra.mxu0 0.0
    %76 = vmatprep.subr.mxu0 0.0
    %77 = vmatpush1.msra.mxu0 0.0
    %78 = vmatprep.subr.mxu0 0.0
    %79 = vmatpush1.msra.mxu0 0.0
    %80 = vmatprep.subr.mxu0 0.0
    %81 = vmatpush1.msra.mxu0 0.0
    %82 = vmatprep.subr.mxu0 0.0
    %83 = vmatpush1.msra.mxu0 0.0
    %84 = vmatprep.subr.mxu0 0.0
    %85 = vmatpush1.msra.mxu0 %v63
    %86 = vmatprep.subr.mxu0 0.0
    %87 = vmatpush1.msra.mxu0 %v62
    %88 = vmatprep.subr.mxu0 0.0
    %89 = vmatpush1.msra.mxu0 %v61
    %90 = vmatprep.subr.mxu0 0.0
    %91 = vmatpush1.msra.mxu0 %v60
    %92 = vmatprep.subr.mxu0 0.0
    %93 = vmatpush1.msra.mxu0 %v59
    %94 = vmatprep.subr.mxu0 0.0
    %95 = vmatpush1.msra.mxu0 %v58
    %96 = vmatprep.subr.mxu0 0.0
    %97 = vmatpush1.msra.mxu0 %v57
    %98 = vmatprep.subr.mxu0 0.0
    %99 = vmatpush1.msra.mxu0 %v56
    %100 = vmatprep.subr.mxu0 0.0
    %101 = vmatpush2.msra.mxu0 0.0
    %102 = vmatprep.subr.mxu0 0.0
    %103 = vmatpush2.msra.mxu0 0.0
    %104 = vmatprep.subr.mxu0 0.0
    %105 = vmatpush2.msra.mxu0 0.0
    %106 = vmatprep.subr.mxu0 0.0
    %107 = vmatpush2.msra.mxu0 0.0
    %108 = vmatprep.subr.mxu0 0.0
    %109 = vmatpush2.msra.mxu0 0.0
    %110 = vmatprep.subr.mxu0 0.0
    %111 = vmatpush2.msra.mxu0 0.0
    %112 = vmatprep.subr.mxu0 0.0
    %113 = vmatpush2.msra.mxu0 0.0
    %114 = vmatprep.subr.mxu0 0.0
    %115 = vmatpush2.msra.mxu0 0.0
    %116 = vmatprep.subr.mxu0 0.0
    %117 = vmatpush2.msra.mxu0 0.0
    %118 = vmatprep.subr.mxu0 0.0
    %119 = vmatpush2.msra.mxu0 0.0
    %120 = vmatprep.subr.mxu0 0.0
    %121 = vmatpush2.msra.mxu0 0.0
    %122 = vmatprep.subr.mxu0 0.0
    %123 = vmatpush2.msra.mxu0 0.0
    %124 = vmatprep.subr.mxu0 0.0
    %125 = vmatpush2.msra.mxu0 0.0
    %126 = vmatprep.subr.mxu0 0.0
    %127 = vmatpush2.msra.mxu0 0.0
    %128 = vmatprep.subr.mxu0 0.0
    %129 = vmatpush2.msra.mxu0 0.0
    %130 = vmatprep.subr.mxu0 0.0
    %131 = vmatpush2.msra.mxu0 0.0
    %132 = vmatprep.mubr.f32.mxu0 0.0
    %133 = vmatmul.mubr.f32.gmra.mxu0 %v66
    %v134 = vpop.f32.mrf.mxu0
    %v135 = vadd.f32 0.0, %v134
    %v136 = vpop.f32.mrf.mxu0
    %137 = vdwg.mxu0
    %vm138 = vcmask 261120
    %v140 = vsel %vm138, %v51, 0
    %142 = vmatprep.subr.mxu0 0.0
    %143 = vmatpush1.msra.mxu0 0.0
    %144 = vmatprep.subr.mxu0 0.0
    %145 = vmatpush1.msra.mxu0 0.0
    %146 = vmatprep.subr.mxu0 0.0
    %147 = vmatpush1.msra.mxu0 0.0
    %148 = vmatprep.subr.mxu0 0.0
    %149 = vmatpush1.msra.mxu0 0.0
    %150 = vmatprep.subr.mxu0 0.0
    %151 = vmatpush1.msra.mxu0 0.0
    %152 = vmatprep.subr.mxu0 0.0
    %153 = vmatpush1.msra.mxu0 0.0
    %154 = vmatprep.subr.mxu0 0.0
    %155 = vmatpush1.msra.mxu0 0.0
    %156 = vmatprep.subr.mxu0 0.0
    %157 = vmatpush1.msra.mxu0 0.0
    %158 = vmatprep.subr.mxu0 0.0
    %159 = vmatpush1.msra.mxu0 0.0
    %160 = vmatprep.subr.mxu0 0.0
    %161 = vmatpush1.msra.mxu0 0.0
    %162 = vmatprep.subr.mxu0 0.0
    %163 = vmatpush1.msra.mxu0 0.0
    %164 = vmatprep.subr.mxu0 0.0
    %165 = vmatpush1.msra.mxu0 0.0
    %166 = vmatprep.subr.mxu0 0.0
    %167 = vmatpush1.msra.mxu0 %v55
    %168 = vmatprep.subr.mxu0 0.0
    %169 = vmatpush1.msra.mxu0 %v54
    %170 = vmatprep.subr.mxu0 0.0
    %171 = vmatpush1.msra.mxu0 %v53
    %172 = vmatprep.subr.mxu0 0.0
    %173 = vmatpush1.msra.mxu0 %v52
    %174 = vmatprep.subr.mxu0 0.0
    %175 = vmatpush2.msra.mxu0 0.0
    %176 = vmatprep.subr.mxu0 0.0
    %177 = vmatpush2.msra.mxu0 0.0
    %178 = vmatprep.subr.mxu0 0.0
    %179 = vmatpush2.msra.mxu0 0.0
    %180 = vmatprep.subr.mxu0 0.0
    %181 = vmatpush2.msra.mxu0 0.0
    %182 = vmatprep.subr.mxu0 0.0
    %183 = vmatpush2.msra.mxu0 0.0
    %184 = vmatprep.subr.mxu0 0.0
    %185 = vmatpush2.msra.mxu0 0.0
    %186 = vmatprep.subr.mxu0 0.0
    %187 = vmatpush2.msra.mxu0 0.0
    %188 = vmatprep.subr.mxu0 0.0
    %189 = vmatpush2.msra.mxu0 0.0
    %190 = vmatprep.subr.mxu0 0.0
    %191 = vmatpush2.msra.mxu0 0.0
    %192 = vmatprep.subr.mxu0 0.0
    %193 = vmatpush2.msra.mxu0 0.0
    %194 = vmatprep.subr.mxu0 0.0
    %195 = vmatpush2.msra.mxu0 0.0
    %196 = vmatprep.subr.mxu0 0.0
    %197 = vmatpush2.msra.mxu0 0.0
    %198 = vmatprep.subr.mxu0 0.0
    %199 = vmatpush2.msra.mxu0 0.0
    %200 = vmatprep.subr.mxu0 0.0
    %201 = vmatpush2.msra.mxu0 0.0
    %202 = vmatprep.subr.mxu0 0.0
    %203 = vmatpush2.msra.mxu0 0.0
    %204 = vmatprep.subr.mxu0 0.0
    %205 = vmatpush2.msra.mxu0 0.0
    %206 = vmatprep.mubr.f32.mxu0 0.0
    %207 = vmatmul.mubr.f32.gmra.mxu0 %v140
    %v208 = vpop.f32.mrf.mxu0
    %v209 = vadd.f32 1.1920929e-07, %v208
    %v210 = vpop.f32.mrf.mxu0
    %211 = vdwg.mxu0
    %v212 = vmul.f32 %v51, %v135
    %v213 = vrcp.pop %v209
    %v214 = vmul.f32 %v212, %v213
    %219 = vrot.lane.b32.xlu0 %v52, 96
    %v220 = vpop.permute.xlu0 %219
    %221 = vrot.lane.b32.xlu0 %v53, 96
    %v222 = vpop.permute.xlu0 %221
    %223 = vrot.lane.b32.xlu0 %v54, 96
    %v224 = vpop.permute.xlu0 %223
    %225 = vrot.lane.b32.xlu0 %v55, 96
    %v226 = vpop.permute.xlu0 %225
    %v232 = vsel %vm138, %v214, 0
    %234 = vmatprep.subr.mxu0 0.0
    %235 = vmatpush1.msra.mxu0 0.0
    %236 = vmatprep.subr.mxu0 0.0
    %237 = vmatpush1.msra.mxu0 0.0
    %238 = vmatprep.subr.mxu0 0.0
    %239 = vmatpush1.msra.mxu0 0.0
    %240 = vmatprep.subr.mxu0 0.0
    %241 = vmatpush1.msra.mxu0 0.0
    %242 = vmatprep.subr.mxu0 0.0
    %243 = vmatpush1.msra.mxu0 0.0
    %244 = vmatprep.subr.mxu0 0.0
    %245 = vmatpush1.msra.mxu0 0.0
    %246 = vmatprep.subr.mxu0 0.0
    %247 = vmatpush1.msra.mxu0 0.0
    %248 = vmatprep.subr.mxu0 0.0
    %249 = vmatpush1.msra.mxu0 0.0
    %250 = vmatprep.subr.mxu0 0.0
    %251 = vmatpush1.msra.mxu0 0.0
    %252 = vmatprep.subr.mxu0 0.0
    %253 = vmatpush1.msra.mxu0 0.0
    %254 = vmatprep.subr.mxu0 0.0
    %255 = vmatpush1.msra.mxu0 0.0
    %256 = vmatprep.subr.mxu0 0.0
    %257 = vmatpush1.msra.mxu0 0.0
    %258 = vmatprep.subr.mxu0 0.0
    %259 = vmatpush1.msra.mxu0 %v226
    %260 = vmatprep.subr.mxu0 0.0
    %261 = vmatpush1.msra.mxu0 %v224
    %262 = vmatprep.subr.mxu0 0.0
    %263 = vmatpush1.msra.mxu0 %v222
    %264 = vmatprep.subr.mxu0 0.0
    %265 = vmatpush1.msra.mxu0 %v220
    %266 = vmatprep.subr.mxu0 0.0
    %267 = vmatpush2.msra.mxu0 0.0
    %268 = vmatprep.subr.mxu0 0.0
    %269 = vmatpush2.msra.mxu0 0.0
    %270 = vmatprep.subr.mxu0 0.0
    %271 = vmatpush2.msra.mxu0 0.0
    %272 = vmatprep.subr.mxu0 0.0
    %273 = vmatpush2.msra.mxu0 0.0
    %274 = vmatprep.subr.mxu0 0.0
    %275 = vmatpush2.msra.mxu0 0.0
    %276 = vmatprep.subr.mxu0 0.0
    %277 = vmatpush2.msra.mxu0 0.0
    %278 = vmatprep.subr.mxu0 0.0
    %279 = vmatpush2.msra.mxu0 0.0
    %280 = vmatprep.subr.mxu0 0.0
    %281 = vmatpush2.msra.mxu0 0.0
    %282 = vmatprep.subr.mxu0 0.0
    %283 = vmatpush2.msra.mxu0 0.0
    %284 = vmatprep.subr.mxu0 0.0
    %285 = vmatpush2.msra.mxu0 0.0
    %286 = vmatprep.subr.mxu0 0.0
    %287 = vmatpush2.msra.mxu0 0.0
    %288 = vmatprep.subr.mxu0 0.0
    %289 = vmatpush2.msra.mxu0 0.0
    %290 = vmatprep.subr.mxu0 0.0
    %291 = vmatpush2.msra.mxu0 0.0
    %292 = vmatprep.subr.mxu0 0.0
    %293 = vmatpush2.msra.mxu0 0.0
    %294 = vmatprep.subr.mxu0 0.0
    %295 = vmatpush2.msra.mxu0 0.0
    %296 = vmatprep.subr.mxu0 0.0
    %297 = vmatpush2.msra.mxu0 0.0
    %298 = vmatprep.mubr.f32.mxu0 0.0
    %299 = vmatmul.mubr.f32.gmra.mxu0 %v232
    %v300 = vpop.f32.mrf.mxu0
    %v301 = vadd.f32 1.1920929e-07, %v300
    %v302 = vpop.f32.mrf.mxu0
    %303 = vdwg.mxu0
    %305 = vrot.lane.b32.xlu0 %v135, 96
    %v306 = vpop.permute.xlu0 %305
    %v308 = vmul.f32 %v214, %v306
    %v309 = vrcp.pop %v301
    %v310 = vmul.f32 %v308, %v309
    %311 = vrot.lane.b32.xlu0 %v52, 64
    %v312 = vpop.permute.xlu0 %311
    %313 = vrot.lane.b32.xlu0 %v53, 64
    %v314 = vpop.permute.xlu0 %313
    %315 = vrot.lane.b32.xlu0 %v54, 64
    %v316 = vpop.permute.xlu0 %315
    %317 = vrot.lane.b32.xlu0 %v55, 64
    %v318 = vpop.permute.xlu0 %317
    %v324 = vsel %vm138, %v310, 0
    %326 = vmatprep.subr.mxu0 0.0
    %327 = vmatpush1.msra.mxu0 0.0
    %328 = vmatprep.subr.mxu0 0.0
    %329 = vmatpush1.msra.mxu0 0.0
    %330 = vmatprep.subr.mxu0 0.0
    %331 = vmatpush1.msra.mxu0 0.0
    %332 = vmatprep.subr.mxu0 0.0
    %333 = vmatpush1.msra.mxu0 0.0
    %334 = vmatprep.subr.mxu0 0.0
    %335 = vmatpush1.msra.mxu0 0.0
    %336 = vmatprep.subr.mxu0 0.0
    %337 = vmatpush1.msra.mxu0 0.0
    %338 = vmatprep.subr.mxu0 0.0
    %339 = vmatpush1.msra.mxu0 0.0
    %340 = vmatprep.subr.mxu0 0.0
    %341 = vmatpush1.msra.mxu0 0.0
    %342 = vmatprep.subr.mxu0 0.0
    %343 = vmatpush1.msra.mxu0 0.0
    %344 = vmatprep.subr.mxu0 0.0
    %345 = vmatpush1.msra.mxu0 0.0
    %346 = vmatprep.subr.mxu0 0.0
    %347 = vmatpush1.msra.mxu0 0.0
    %348 = vmatprep.subr.mxu0 0.0
    %349 = vmatpush1.msra.mxu0 0.0
    %350 = vmatprep.subr.mxu0 0.0
    %351 = vmatpush1.msra.mxu0 %v318
    %352 = vmatprep.subr.mxu0 0.0
    %353 = vmatpush1.msra.mxu0 %v316
    %354 = vmatprep.subr.mxu0 0.0
    %355 = vmatpush1.msra.mxu0 %v314
    %356 = vmatprep.subr.mxu0 0.0
    %357 = vmatpush1.msra.mxu0 %v312
    %358 = vmatprep.subr.mxu0 0.0
    %359 = vmatpush2.msra.mxu0 0.0
    %360 = vmatprep.subr.mxu0 0.0
    %361 = vmatpush2.msra.mxu0 0.0
    %362 = vmatprep.subr.mxu0 0.0
    %363 = vmatpush2.msra.mxu0 0.0
    %364 = vmatprep.subr.mxu0 0.0
    %365 = vmatpush2.msra.mxu0 0.0
    %366 = vmatprep.subr.mxu0 0.0
    %367 = vmatpush2.msra.mxu0 0.0
    %368 = vmatprep.subr.mxu0 0.0
    %369 = vmatpush2.msra.mxu0 0.0
    %370 = vmatprep.subr.mxu0 0.0
    %371 = vmatpush2.msra.mxu0 0.0
    %372 = vmatprep.subr.mxu0 0.0
    %373 = vmatpush2.msra.mxu0 0.0
    %374 = vmatprep.subr.mxu0 0.0
    %375 = vmatpush2.msra.mxu0 0.0
    %376 = vmatprep.subr.mxu0 0.0
    %377 = vmatpush2.msra.mxu0 0.0
    %378 = vmatprep.subr.mxu0 0.0
    %379 = vmatpush2.msra.mxu0 0.0
    %380 = vmatprep.subr.mxu0 0.0
    %381 = vmatpush2.msra.mxu0 0.0
    %382 = vmatprep.subr.mxu0 0.0
    %383 = vmatpush2.msra.mxu0 0.0
    %384 = vmatprep.subr.mxu0 0.0
    %385 = vmatpush2.msra.mxu0 0.0
    %386 = vmatprep.subr.mxu0 0.0
    %387 = vmatpush2.msra.mxu0 0.0
    %388 = vmatprep.subr.mxu0 0.0
    %389 = vmatpush2.msra.mxu0 0.0
    %390 = vmatprep.mubr.f32.mxu0 0.0
    %391 = vmatmul.mubr.f32.gmra.mxu0 %v324
    %v392 = vpop.f32.mrf.mxu0
    %v393 = vadd.f32 1.1920929e-07, %v392
    %v394 = vpop.f32.mrf.mxu0
    %395 = vdwg.mxu0
    %396 = vrot.lane.b32.xlu0 %v135, 64
    %v397 = vpop.permute.xlu0 %396
    %v399 = vmul.f32 %v310, %v397
    %v400 = vrcp.pop %v393
    %v401 = vmul.f32 %v399, %v400
    %v402 = vld [vmem:[%s4] sm:$0xff]
    %v403 = vld [vmem:[%s4 + $0x8] sm:$0xff]
    %v404 = vld [vmem:[%s4 + $0x10] sm:$0xff]
    %v405 = vld [vmem:[%s4 + $0x18] sm:$0xff]
    %v406 = vld [vmem:[%s5] sm:$0x1]
    %v408 = vlaneseq
    %v409 = vshrl.u32 %v408, 7
    %v410 = vsub.s32 0, %v409
    %v411 = vrot.slane %v406, %v410
    %v414 = vsel %vm138, %v401, 0
    %416 = vmatprep.subr.mxu0 0.0
    %417 = vmatpush1.msra.mxu0 0.0
    %418 = vmatprep.subr.mxu0 0.0
    %419 = vmatpush1.msra.mxu0 0.0
    %420 = vmatprep.subr.mxu0 0.0
    %421 = vmatpush1.msra.mxu0 0.0
    %422 = vmatprep.subr.mxu0 0.0
    %423 = vmatpush1.msra.mxu0 0.0
    %424 = vmatprep.subr.mxu0 0.0
    %425 = vmatpush1.msra.mxu0 0.0
    %426 = vmatprep.subr.mxu0 0.0
    %427 = vmatpush1.msra.mxu0 0.0
    %428 = vmatprep.subr.mxu0 0.0
    %429 = vmatpush1.msra.mxu0 0.0
    %430 = vmatprep.subr.mxu0 0.0
    %431 = vmatpush1.msra.mxu0 0.0
    %432 = vmatprep.subr.mxu0 0.0
    %433 = vmatpush1.msra.mxu0 0.0
    %434 = vmatprep.subr.mxu0 0.0
    %435 = vmatpush1.msra.mxu0 0.0
    %436 = vmatprep.subr.mxu0 0.0
    %437 = vmatpush1.msra.mxu0 0.0
    %438 = vmatprep.subr.mxu0 0.0
    %439 = vmatpush1.msra.mxu0 0.0
    %440 = vmatprep.subr.mxu0 0.0
    %441 = vmatpush1.msra.mxu0 %v405
    %442 = vmatprep.subr.mxu0 0.0
    %443 = vmatpush1.msra.mxu0 %v404
    %444 = vmatprep.subr.mxu0 0.0
    %445 = vmatpush1.msra.mxu0 %v403
    %446 = vmatprep.subr.mxu0 0.0
    %447 = vmatpush1.msra.mxu0 %v402
    %448 = vmatprep.subr.mxu0 0.0
    %449 = vmatpush2.msra.mxu0 0.0
    %450 = vmatprep.subr.mxu0 0.0
    %451 = vmatpush2.msra.mxu0 0.0
    %452 = vmatprep.subr.mxu0 0.0
    %453 = vmatpush2.msra.mxu0 0.0
    %454 = vmatprep.subr.mxu0 0.0
    %455 = vmatpush2.msra.mxu0 0.0
    %456 = vmatprep.subr.mxu0 0.0
    %457 = vmatpush2.msra.mxu0 0.0
    %458 = vmatprep.subr.mxu0 0.0
    %459 = vmatpush2.msra.mxu0 0.0
    %460 = vmatprep.subr.mxu0 0.0
    %461 = vmatpush2.msra.mxu0 0.0
    %462 = vmatprep.subr.mxu0 0.0
    %463 = vmatpush2.msra.mxu0 0.0
    %464 = vmatprep.subr.mxu0 0.0
    %465 = vmatpush2.msra.mxu0 0.0
    %466 = vmatprep.subr.mxu0 0.0
    %467 = vmatpush2.msra.mxu0 0.0
    %468 = vmatprep.subr.mxu0 0.0
    %469 = vmatpush2.msra.mxu0 0.0
    %470 = vmatprep.subr.mxu0 0.0
    %471 = vmatpush2.msra.mxu0 0.0
    %472 = vmatprep.subr.mxu0 0.0
    %473 = vmatpush2.msra.mxu0 0.0
    %474 = vmatprep.subr.mxu0 0.0
    %475 = vmatpush2.msra.mxu0 0.0
    %476 = vmatprep.subr.mxu0 0.0
    %477 = vmatpush2.msra.mxu0 0.0
    %478 = vmatprep.subr.mxu0 0.0
    %479 = vmatpush2.msra.mxu0 0.0
    %480 = vmatprep.mubr.f32.mxu0 0.0
    %481 = vmatmul.mubr.f32.gmra.mxu0 %v414
    %v482 = vpop.f32.mrf.mxu0
    %v483 = vadd.f32 %v411, %v482
    %v484 = vpop.f32.mrf.mxu0
    %485 = vdwg.mxu0
    %vm486 = vcmask 64512
    %487 = vst.msk [vmem:[#allocation7] sm:$0xff] %vm486, %v483
    // Predicated region
    $region34: #{tpu_custom_call.1} parent=1 // pred_check
      _
    $region35: #{tpu_custom_call.1} parent=1 // pred_check_branch
      %489 = sbr.rel (0) target = $region37
    $region36: #{tpu_custom_call.1} parent=1 // pred_region
      %s491 = ssub.s32 128, 128
      %492 = vsyncadd [#allocation4], %s491
      %s494 = sshll.u32 [#allocation7], 4
      %s495 = int_to_ptr.vmem [resolvable:$true] %s494
      %497 = dma.vmem_to_hbm [thread:$0]  %s495, 128, %s6, [#allocation4]
    $region37: #{tpu_custom_call.1} parent=1 // pred_fallthru
      _
    // Predicated region
    $region38: #{tpu_custom_call.1} parent=1 // pred_check
      _
    $region39: #{tpu_custom_call.1} parent=1 // pred_check_branch
      %499 = sbr.rel (0) target = $region41
    $region40: #{tpu_custom_call.1} parent=1 // pred_region
      %500 = dma.done [#allocation4], 128
    $region41: #{tpu_custom_call.1} parent=1 // pred_fallthru
      _
    %501 = vsyncpa [#allocation3], 1
    %502 = vsyncpa [#allocation6], 1
    %503 = vsyncpa [#allocation4], 1

</llo_original>
